<compile_context>
chip_gen: v6e
topology: v6e:2x2x1
jax: 0.10.0
libtpu: 0.0.40
codegen_flags: <defaults>
</compile_context>

<pallas_src>
import math
from functools import partial

import jax
import jax.numpy as jnp
from jax.experimental import pallas as pl
from jax.experimental.pallas import tpu as pltpu


_LANE = 128                       # TPU lane width (last-dim vreg extent)
_SUBLANE = 8                      # sublane alignment for block shapes
_TARGET_TILE_BYTES = 4 * 1024 * 1024   # ~4 MiB/block; 4 buffers => ~16 MiB VMEM
_MAX_TF = 8 * 1024                # cap on lane-tile width (elements)
_VMEM_LIMIT_BYTES = 32 * 1024 * 1024   # fits v7x's 64 MiB physical / all scoped


def _copy_kernel(x_ref, o_ref):
    # One lane-dense block: a single aligned vector copy (pure HBM streaming).
    o_ref[...] = x_ref[...]


def _stream_copy(x2d: jax.Array) -> jax.Array:
    """Roofline-bound streaming copy of a 2-D array via Pallas.

    Block shape is (tb, tf) with tf = full width (or a 128-multiple cap) and
    tb a multiple of 8 sized for ~4 MiB blocks.  Grids use pl.cdiv, so uneven
    boundaries are handled by Pallas' partial-block masking — no full-dim
    fallback that could exceed the scoped-VMEM limit.
    """
    R, C = x2d.shape
    itemsize = jnp.dtype(x2d.dtype).itemsize

    # Lane (last-dim) tile: full C when small, else a 128-aligned cap.
    tf = C if C <= _MAX_TF else _MAX_TF

    # Sublane (second-to-last) tile: multiple of 8 targeting ~4 MiB per block,
    # or the full row count when the array is small.
    tb = (_TARGET_TILE_BYTES // (tf * itemsize)) // _SUBLANE * _SUBLANE
    tb = max(_SUBLANE, tb)
    if tb >= R:
        tb = R

    grid = (pl.cdiv(R, tb), pl.cdiv(C, tf))

    return pl.pallas_call(
        _copy_kernel,
        out_shape=jax.ShapeDtypeStruct((R, C), x2d.dtype),
        grid=grid,
        in_specs=[pl.BlockSpec((tb, tf), lambda i, j: (i, j))],
        out_specs=pl.BlockSpec((tb, tf), lambda i, j: (i, j)),
        compiler_params=pltpu.CompilerParams(
            # Pure elementwise copy: both grid axes are independent, so both
            # TensorCores on v7x can take a share of the blocks.
            dimension_semantics=("parallel", "parallel"),
            vmem_limit_bytes=_VMEM_LIMIT_BYTES,
        ),
        # Pure memory traffic: 0 flops, read + write of every byte.
        cost_estimate=pl.CostEstimate(
            flops=0,
            transcendentals=0,
            bytes_accessed=2 * R * C * itemsize,
        ),
    )(x2d)


@partial(jax.jit, static_argnames=("n_channels",))
def unflatten(x: jax.Array, n_channels: int) -> jax.Array:
    """Pallas equivalent of UnFlatten(n_channels).forward(x)."""
    B, F = x.shape
    size = math.isqrt(F // n_channels)  # integer isqrt: no float under-rounding
    if n_channels * size * size != F:
        raise ValueError("features must equal n_channels * size**2")

    total = B * F
    if total % _LANE == 0:
        # Shape-agnostic path (the common case): view the flat bytes as a
        # (total/128, 128) lane-dense slab so every block is one contiguous
        # DMA and every store is an unmasked 128-wide vst, regardless of how
        # B / n_channels / size factor.
        flat = _stream_copy(x.reshape(total // _LANE, _LANE))
    else:
        # Rare unaligned total: copy in the natural (B, F) layout; only the
        # boundary blocks get masked stores.
        flat = _stream_copy(x)

    # Free (metadata-only under jit) view to the NCHW output shape.
    return flat.reshape(B, n_channels, size, size)


if __name__ == "__main__":
    # Small, module-consistent shapes: batch=2, n_channels=4, spatial=16
    # => flat feature dim = 4 * 16 * 16 = 1024.
    key = jax.random.PRNGKey(0)
    B, C, S = 2, 4, 16
    x = jax.random.normal(key, (B, C * S * S), dtype=jnp.float32)

    y = unflatten(x, n_channels=C)
    y = jax.block_until_ready(y)

    # Reference: exactly what torch .view(B, C, S, S) does on contiguous input.
    y_ref = x.reshape(B, C, S, S)

    assert y.shape == (B, C, S, S), y.shape
    assert y.dtype == x.dtype
    assert jnp.array_equal(y, y_ref), "Pallas unflatten mismatch vs reshape ref"

    print("KERNEL_OK")
</pallas_src>

<mosaic_0001>
module attributes {stable_mosaic.version = 11 : i64} {
  func.func @_copy_kernel(%arg0: i32, %arg1: i32, %arg2: memref<16x128xf32, #tpu.memory_space<vmem>>, %arg3: memref<16x128xf32, #tpu.memory_space<vmem>>) attributes {dimension_semantics = [#tpu.dimension_semantics<parallel>, #tpu.dimension_semantics<parallel>], iteration_bounds = array<i64: 1, 1>, scalar_prefetch = 0 : i64, scratch_operands = 0 : i64, tpu.core_type = #tpu.core_type<tc>, window_params = [{transform_indices = @transform_0, window_bounds = array<i64: 16, 128>}, {transform_indices = @transform_1, window_bounds = array<i64: 16, 128>}]} {
    %c0 = arith.constant 0 : index
    %c0_0 = arith.constant 0 : index
    %0 = vector.load %arg2[%c0, %c0_0] : memref<16x128xf32, #tpu.memory_space<vmem>>, vector<16x128xf32>
    %c0_1 = arith.constant 0 : index
    %c0_2 = arith.constant 0 : index
    %1 = vector.load %arg3[%c0_1, %c0_2] : memref<16x128xf32, #tpu.memory_space<vmem>>, vector<16x128xf32>
    tpu.vector_store %arg3[%c0_1, %c0_2], %0 {strides = array<i32>} : memref<16x128xf32, #tpu.memory_space<vmem>>, vector<16x128xf32>,
    return
  }
  func.func @transform_0(%arg0: i32, %arg1: i32) -> (i32, i32) {
    %c0_i32 = arith.constant 0 : i32
    return %arg0, %arg1 : i32, i32
  }
  func.func @transform_1(%arg0: i32, %arg1: i32) -> (i32, i32) {
    %c0_i32 = arith.constant 0 : i32
    return %arg0, %arg1 : i32, i32
  }
}

</mosaic_0001>

<llo_original>
// kernel: unflatten.1
$region0: #{unflatten.1}
  #allocation0 [shape = 'u32[]', space=smem, size = 0x4, offset = 0x4, fixed_abs, tag = 'smem constant byte address 0x4 - core index']
  #allocation1 [shape = 'u32[144,128]{1,0:T(1,128)}', space=vmem, size = 0x12000, scoped, tag = 'internal scratch']
  %s0 = inlined_call_operand.vmem [shape: f32[16,128], index: 0, kind: input, shape index: {}]
  %s1 = inlined_call_operand.vmem [shape: f32[16,128], index: 1, kind: output, shape index: {}]
  %s2 = sld [smem:[#allocation0]]
  $region14: #{unflatten.1} parent=0
    _
  %s4 = ssub.s32 1, %s2
  %s5 = scalar_select 0, %s4, %s2
  // Predicated region
  $region2: #{unflatten.1} parent=0 // pred_check
    _
  $region3: #{unflatten.1} parent=0 // pred_check_branch
    %7 = sbr.rel (0) target = $region5
  $region4: #{unflatten.1} parent=0 // pred_region
    _
  $region5: #{unflatten.1} parent=0 // pred_fallthru
    _
  %v8 = vld [vmem:[%s0] sm:$0xff]
  %v9 = vld [vmem:[%s0 + $0x8] sm:$0xff]
  %10 = vst [vmem:[%s1] sm:$0xff] %v8
  %11 = vst [vmem:[%s1 + $0x8] sm:$0xff] %v9
  // Predicated region
  $region6: #{unflatten.1} parent=0 // pred_check
    _
  $region7: #{unflatten.1} parent=0 // pred_check_branch
    %13 = sbr.rel (0) target = $region9
  $region8: #{unflatten.1} parent=0 // pred_region
    _
  $region9: #{unflatten.1} parent=0 // pred_fallthru
    _
  // Predicated region
  $region10: #{unflatten.1} parent=0 // pred_check
    _
  $region11: #{unflatten.1} parent=0 // pred_check_branch
    %15 = sbr.rel (0) target = $region13
  $region12: #{unflatten.1} parent=0 // pred_region
    _
  $region13: #{unflatten.1} parent=0 // pred_fallthru
    _

</llo_original>
